<compile_context>
chip_gen: v5e
topology: v5e:2x2
jax: 0.10.0
libtpu: 0.0.40
codegen_flags: <defaults>
</compile_context>

<pallas_src>
import functools
import math

import jax
import jax.numpy as jnp
from jax.experimental import pallas as pl
from jax.experimental.pallas import tpu as pltpu


def _round_up(x: int, m: int) -> int:
    return ((x + m - 1) // m) * m


def _vmem_limit_bytes() -> int:
    """Per-generation scoped-VMEM budget (v7x has 64 MiB/TC, v5e/v6e 128 MiB)."""
    cap = 64 * 1024 * 1024
    try:
        info = pltpu.get_tpu_info()
        cap = int(getattr(info, "vmem_capacity_bytes", cap))
    except Exception:
        pass
    return max(32 * 1024 * 1024, min(cap * 3 // 4, 96 * 1024 * 1024))


# ---------------------------------------------------------------------------
# Kernels
# ---------------------------------------------------------------------------
def _mlp_kernel_k1(x_ref, w_ref, b_ref, o_ref):
    """Single K-step: fused matmul + bias + LeakyReLU, no scratch accumulator."""
    y = jnp.dot(x_ref[...], w_ref[...], preferred_element_type=jnp.float32)
    y = y + b_ref[...]                       # bias is f32 [1, tn], broadcasts over rows
    y = jnp.maximum(y, 0.1 * y)              # LeakyReLU(0.1)
    o_ref[...] = y.astype(o_ref.dtype)


def _mlp_kernel(x_ref, w_ref, b_ref, o_ref, acc_ref):
    """General K-reduction: f32 accumulator, epilogue on last K step only."""
    k = pl.program_id(2)
    prod = jnp.dot(x_ref[...], w_ref[...], preferred_element_type=jnp.float32)

    @pl.when(k == 0)
    def _():                                  # first step: overwrite (no zero-fill pass)
        acc_ref[...] = prod

    @pl.when(k > 0)
    def _():
        acc_ref[...] += prod

    @pl.when(k == pl.num_programs(2) - 1)
    def _():
        y = acc_ref[...] + b_ref[...]
        y = jnp.maximum(y, 0.1 * y)           # LeakyReLU(0.1)
        o_ref[...] = y.astype(o_ref.dtype)    # single, lane-dense store per output tile


# ---------------------------------------------------------------------------
# Host-side wrappers
# ---------------------------------------------------------------------------
def prepare_mlp_params(weight, bias, *, compute_dtype=jnp.bfloat16):
    """One-time parameter prep (outside the hot path).

    Transposes W -> [n_in, n_out], optionally casts to the MXU input dtype
    (bf16 by default, f32 accumulation stays in-kernel), and zero-pads W/bias
    to the tile grid so no per-call weight pad/cast HBM pass is needed.
    """
    n_out, n_in = weight.shape
    # Lane-aligned tile caps; tn capped at 512 so the footprint is safe on
    # v7x's 64 MiB VMEM, tk up to 1024 to keep K steps few.
    tn = min(512, _round_up(n_out, 128))
    tk = min(1024, _round_up(n_in, 128))
    kp = _round_up(n_in, tk)
    np_ = _round_up(n_out, tn)

    weight_t = weight.T                                   # [n_in, n_out]
    if compute_dtype is not None:
        weight_t = weight_t.astype(compute_dtype)
    if (kp, np_) != (n_in, n_out):
        weight_t = jnp.pad(weight_t, ((0, kp - n_in), (0, np_ - n_out)))

    bias2 = bias.astype(jnp.float32).reshape(1, n_out)
    if np_ != n_out:
        bias2 = jnp.pad(bias2, ((0, 0), (0, np_ - n_out)))

    return {
        "weight_t": weight_t,   # [kp, np_], compute dtype
        "bias2": bias2,         # [1, np_], f32
        "n_in": n_in,
        "n_out": n_out,
        "tn": tn,
        "tk": tk,
    }


@functools.partial(jax.jit, static_argnames=("n_out", "tm", "tn", "tk"))
def _mlp_call(x2, weight_t, bias2, *, n_out, tm, tn, tk):
    m, n_in = x2.shape
    kp, np_ = weight_t.shape
    out_dtype = x2.dtype

    # Cast activations to the (pre-cast) weight dtype for the MXU feed.
    if x2.dtype != weight_t.dtype:
        x2 = x2.astype(weight_t.dtype)

    mp = _round_up(m, tm)
    if (mp, kp) != (m, n_in):
        x2 = jnp.pad(x2, ((0, mp - m), (0, kp - n_in)))   # zero K-pad: adds 0 to the dot

    num_k = kp // tk
    in_itemsize = jnp.dtype(x2.dtype).itemsize
    cost = pl.CostEstimate(
        flops=2 * m * n_in * n_out,
        transcendentals=0,
        bytes_accessed=(mp * kp + kp * np_) * in_itemsize
        + np_ * 4
        + mp * np_ * jnp.dtype(out_dtype).itemsize,
    )

    if num_k == 1:
        # TODO(synk): on v5e, pipeline_mode=pl.Buffered(3) on the weight spec can
        # hide exposed weight DMA for thin-M mem-bound shapes (enable if profiled).
        out = pl.pallas_call(
            _mlp_kernel_k1,
            out_shape=jax.ShapeDtypeStruct((mp, np_), out_dtype),
            grid_spec=pltpu.PrefetchScalarGridSpec(
                num_scalar_prefetch=0,
                grid=(mp // tm, np_ // tn),
                in_specs=[
                    pl.BlockSpec((tm, tk), lambda i, j: (i, 0)),
                    pl.BlockSpec((tk, tn), lambda i, j: (0, j)),
                    pl.BlockSpec((1, tn), lambda i, j: (0, j)),
                ],
                out_specs=pl.BlockSpec((tm, tn), lambda i, j: (i, j)),
            ),
            compiler_params=pltpu.CompilerParams(
                dimension_semantics=("parallel", "parallel"),
                vmem_limit_bytes=_vmem_limit_bytes(),
            ),
            cost_estimate=cost,
        )(x2, weight_t, bias2)
    else:
        out = pl.pallas_call(
            _mlp_kernel,
            out_shape=jax.ShapeDtypeStruct((mp, np_), out_dtype),
            grid_spec=pltpu.PrefetchScalarGridSpec(
                num_scalar_prefetch=0,
                grid=(mp // tm, np_ // tn, num_k),
                in_specs=[
                    pl.BlockSpec((tm, tk), lambda i, j, k: (i, k)),
                    pl.BlockSpec((tk, tn), lambda i, j, k: (k, j)),
                    pl.BlockSpec((1, tn), lambda i, j, k: (0, j)),
                ],
                out_specs=pl.BlockSpec((tm, tn), lambda i, j, k: (i, j)),
                scratch_shapes=[pltpu.VMEM((tm, tn), jnp.float32)],
            ),
            compiler_params=pltpu.CompilerParams(
                dimension_semantics=("parallel", "parallel", "arbitrary"),
                vmem_limit_bytes=_vmem_limit_bytes(),
            ),
            cost_estimate=cost,
        )(x2, weight_t, bias2)

    if (mp, np_) != (m, n_out):
        out = out[:m, :n_out]
    return out


def mlp_forward(x, params):
    """y = LeakyReLU(x @ W^T + b); SharedDropout(p=0) == identity."""
    n_in = params["n_in"]
    n_out = params["n_out"]
    tn, tk = params["tn"], params["tk"]
    weight_t, bias2 = params["weight_t"], params["bias2"]
    np_ = weight_t.shape[1]

    lead = x.shape[:-1]
    m = math.prod(lead) if lead else 1
    x2 = x.reshape(m, n_in)

    # M tile: bf16 packs 16 rows per sublane group, f32 packs 8.
    align_m = 16 if weight_t.dtype == jnp.bfloat16 else 8
    tm = min(512, _round_up(m, align_m))

    # Make sure at least one 'parallel' grid axis has >=2 blocks on large-M
    # problems so v7x's second TensorCore is not idle (harmless on 1-TC chips).
    if m >= 256 and _round_up(m, tm) // tm == 1 and np_ // tn == 1:
        tm = _round_up((m + 1) // 2, align_m)

    out2 = _mlp_call(x2, weight_t, bias2, n_out=n_out, tm=tm, tn=tn, tk=tk)
    return out2.reshape(*lead, n_out)


def orthogonal_init(key, n_out, n_in, dtype=jnp.float32):
    """Deterministic orthogonal init (matches nn.init.orthogonal_ semantics)."""
    a = jax.random.normal(key, (max(n_out, n_in), min(n_out, n_in)), dtype=jnp.float32)
    q, r = jnp.linalg.qr(a)
    q = q * jnp.sign(jnp.diag(r))[None, :]
    if n_out < n_in:
        q = q.T
    return q[:n_out, :n_in].astype(dtype)


if __name__ == "__main__":
    key = jax.random.PRNGKey(0)
    kx, kw, kx3, kw3 = jax.random.split(key, 4)

    def ref_mlp(x, w, b):
        r = jnp.einsum("...i,oi->...o", x, w,
                       precision=jax.lax.Precision.HIGHEST) + b
        return jnp.maximum(r, 0.1 * r)        # LeakyReLU(0.1)

    # ---- Test 1: small MLP (batch=2, seq=8, n_in=32, n_out=32), f32 compute ----
    batch, seq, n_in, n_out = 2, 8, 32, 32
    x = jax.random.normal(kx, (batch, seq, n_in), dtype=jnp.float32)
    weight = orthogonal_init(kw, n_out, n_in)       # [n_out, n_in], PyTorch layout
    bias = jnp.zeros((n_out,), dtype=jnp.float32)   # reset_parameters(): zeros

    params_f32 = prepare_mlp_params(weight, bias, compute_dtype=None)
    y = mlp_forward(x, params_f32)
    jax.block_until_ready(y)
    ref = ref_mlp(x, weight, bias)
    assert y.shape == (batch, seq, n_out)
    assert jnp.allclose(y, ref, atol=1e-5, rtol=1e-5)

    # ---- Test 2: same problem, default bf16 MXU inputs (f32 accumulation) ----
    params_bf16 = prepare_mlp_params(weight, bias)  # compute_dtype=bf16 by default
    y_bf16 = mlp_forward(x, params_bf16)
    jax.block_until_ready(y_bf16)
    assert jnp.allclose(y_bf16, ref, atol=5e-2, rtol=5e-2)

    # ---- Test 3: multi-K-step accumulator path (n_in > tk), f32 compute ----
    m3, n_in3, n_out3 = 128, 2048, 256
    x3 = jax.random.normal(kx3, (m3, n_in3), dtype=jnp.float32)
    w3 = jax.random.normal(kw3, (n_out3, n_in3), dtype=jnp.float32) / jnp.sqrt(n_in3)
    b3 = jnp.full((n_out3,), 0.25, dtype=jnp.float32)
    params3 = prepare_mlp_params(w3, b3, compute_dtype=None)
    y3 = mlp_forward(x3, params3)
    jax.block_until_ready(y3)
    ref3 = ref_mlp(x3, w3, b3)
    assert jnp.allclose(y3, ref3, atol=1e-3, rtol=1e-3)

    print("KERNEL_OK")
</pallas_src>

<mosaic_0001>
module attributes {stable_mosaic.version = 11 : i64} {
  func.func @_mlp_kernel_k1(%arg0: i32, %arg1: i32, %arg2: memref<16x128xf32, #tpu.memory_space<vmem>>, %arg3: memref<128x128xf32, #tpu.memory_space<vmem>>, %arg4: memref<1x128xf32, #tpu.memory_space<vmem>>, %arg5: memref<16x128xf32, #tpu.memory_space<vmem>>) attributes {dimension_semantics = [#tpu.dimension_semantics<parallel>, #tpu.dimension_semantics<parallel>], iteration_bounds = array<i64: 1, 1>, scalar_prefetch = 0 : i64, scratch_operands = 0 : i64, tpu.core_type = #tpu.core_type<tc>, window_params = [{transform_indices = @transform_0, window_bounds = array<i64: 16, 128>}, {transform_indices = @transform_1, window_bounds = array<i64: 128, 128>}, {transform_indices = @transform_2, window_bounds = array<i64: 1, 128>}, {transform_indices = @transform_3, window_bounds = array<i64: 16, 128>}]} {
    %c0 = arith.constant 0 : index
    %c0_0 = arith.constant 0 : index
    %0 = vector.load %arg2[%c0, %c0_0] : memref<16x128xf32, #tpu.memory_space<vmem>>, vector<16x128xf32>
    %c0_1 = arith.constant 0 : index
    %c0_2 = arith.constant 0 : index
    %1 = vector.load %arg3[%c0_1, %c0_2] : memref<128x128xf32, #tpu.memory_space<vmem>>, vector<128x128xf32>
    %cst = arith.constant dense<0.000000e+00> : vector<16x128xf32>
    %2 = tpu.matmul %0, %1, %cst {dimension_numbers = #tpu.dot_dimension_numbers<[1], [0], [0], [1], [0, 0, 1, 1], [], []>} : vector<16x128xf32>, vector<128x128xf32>, vector<16x128xf32> -> vector<16x128xf32>
    %c0_3 = arith.constant 0 : index
    %c0_4 = arith.constant 0 : index
    %3 = vector.load %arg4[%c0_3, %c0_4] : memref<1x128xf32, #tpu.memory_space<vmem>>, vector<1x128xf32>
    %4 = vector.broadcast %3 : vector<1x128xf32> to vector<16x128xf32>
    %5 = arith.addf %2, %4 : vector<16x128xf32>
    %cst_5 = arith.constant 1.000000e-01 : f32
    %6 = vector.broadcast %cst_5 : f32 to vector<16x128xf32>
    %7 = arith.mulf %6, %5 : vector<16x128xf32>
    %8 = arith.maximumf %5, %7 : vector<16x128xf32>
    %c0_6 = arith.constant 0 : index
    %c0_7 = arith.constant 0 : index
    %9 = vector.load %arg5[%c0_6, %c0_7] : memref<16x128xf32, #tpu.memory_space<vmem>>, vector<16x128xf32>
    tpu.vector_store %arg5[%c0_6, %c0_7], %8 {strides = array<i32>} : memref<16x128xf32, #tpu.memory_space<vmem>>, vector<16x128xf32>,
    return
  }
  func.func @transform_0(%arg0: i32, %arg1: i32) -> (i32, i32) {
    %c0_i32 = arith.constant 0 : i32
    %c0_i32_0 = arith.constant 0 : i32
    return %arg0, %c0_i32 : i32, i32
  }
  func.func @transform_1(%arg0: i32, %arg1: i32) -> (i32, i32) {
    %c0_i32 = arith.constant 0 : i32
    %c0_i32_0 = arith.constant 0 : i32
    return %c0_i32, %arg1 : i32, i32
  }
  func.func @transform_2(%arg0: i32, %arg1: i32) -> (i32, i32) {
    %c0_i32 = arith.constant 0 : i32
    %c0_i32_0 = arith.constant 0 : i32
    return %c0_i32, %arg1 : i32, i32
  }
  func.func @transform_3(%arg0: i32, %arg1: i32) -> (i32, i32) {
    %c0_i32 = arith.constant 0 : i32
    return %arg0, %arg1 : i32, i32
  }
}

</mosaic_0001>

<llo_original>
// kernel: _mlp_call.1
$region0: #{_mlp_call.1}
  #allocation0 [shape = 'u32[]', space=smem, size = 0x4, offset = 0x4, fixed_abs, tag = 'smem constant byte address 0x4 - core index']
  #allocation1 [shape = 'u32[72,128]{1,0:T(1,128)}', space=vmem, size = 0x9000, scoped, tag = 'internal scratch']
  %s0 = inlined_call_operand.vmem [shape: f32[16,128], index: 0, kind: input, shape index: {}]
  %s1 = inlined_call_operand.hbm [shape: f32[128,128], index: 1, kind: input, shape index: {}]
  %s2 = inlined_call_operand.vmem [shape: f32[1,128], index: 2, kind: input, shape index: {}]
  %s3 = inlined_call_operand.hbm [shape: f32[16,128], index: 3, kind: output, shape index: {}]
  %s4 = sld [smem:[#allocation0]]
  $region26: #{_mlp_call.1} parent=0
    _
  %s6 = ssub.s32 1, %s4
  %s7 = scalar_select 0, %s6, %s4
  $region1: #{_mlp_call.1} parent=0
    #allocation2 [shape = 'u8[65536]{0}', space=vmem, size = 0x10000, scoped, tag = 'input window, operand 1, single buffered']
    #allocation3 [shape = 's32[1]{0}', space=sflag, size = 0x4, scoped, tag = 'scoped memory for _mlp_call.1']
    #allocation4 [shape = 's32[1]{0}', space=sflag, size = 0x4, scoped, tag = 'scoped memory for _mlp_call.1']
    #allocation5 [shape = 'u8[8192]{0}', space=vmem, size = 0x2000, scoped, tag = 'output window, operand 0, single buffered']
    %8 = vsyncpa [#allocation3], 0
    %9 = vsyncpa [#allocation4], 0
    // Predicated region
    $region2: #{_mlp_call.1} parent=1 // pred_check
      _
    $region3: #{_mlp_call.1} parent=1 // pred_check_branch
      %11 = sbr.rel (0) target = $region5
    $region4: #{_mlp_call.1} parent=1 // pred_region
      _
    $region5: #{_mlp_call.1} parent=1 // pred_fallthru
      _
    // Predicated region
    $region6: #{_mlp_call.1} parent=1 // pred_check
      _
    $region7: #{_mlp_call.1} parent=1 // pred_check_branch
      %13 = sbr.rel (0) target = $region9
    $region8: #{_mlp_call.1} parent=1 // pred_region
      %15 = vsyncadd [#allocation3], 0
      %s16 = sshll.u32 %s1, 4
      %s17 = int_to_ptr.hbm [resolvable:$true] %s16
      %s18 = sshll.u32 [#allocation2], 4
      %s19 = int_to_ptr.vmem [resolvable:$true] %s18
      %24 = dma.hbm_to_vmem [thread:$0]  %s17, 2048, %s19, [#allocation3], 128, 128, 8
    $region9: #{_mlp_call.1} parent=1 // pred_fallthru
      _
    // Predicated region
    $region10: #{_mlp_call.1} parent=1 // pred_check
      _
    $region11: #{_mlp_call.1} parent=1 // pred_check_branch
      %26 = sbr.rel (0) target = $region13
    $region12: #{_mlp_call.1} parent=1 // pred_region
      _
    $region13: #{_mlp_call.1} parent=1 // pred_fallthru
      _
    // Predicated region
    $region14: #{_mlp_call.1} parent=1 // pred_check
      _
    $region15: #{_mlp_call.1} parent=1 // pred_check_branch
      %28 = sbr.rel (0) target = $region17
    $region16: #{_mlp_call.1} parent=1 // pred_region
      %30 = dma.done [#allocation3], 2048
    $region17: #{_mlp_call.1} parent=1 // pred_fallthru
      _
    %v31 = vld [vmem:[%s0] sm:$0xff]
    %v32 = vld [vmem:[%s0 + $0x8] sm:$0xff]
    %v33 = vld [vmem:[#allocation2] sm:$0xff]
    %v34 = vld [vmem:[#allocation2 + $0x8] sm:$0xff]
    %v35 = vld [vmem:[#allocation2 + $0x10] sm:$0xff]
    %v36 = vld [vmem:[#allocation2 + $0x18] sm:$0xff]
    %v37 = vld [vmem:[#allocation2 + $0x20] sm:$0xff]
    %v38 = vld [vmem:[#allocation2 + $0x28] sm:$0xff]
    %v39 = vld [vmem:[#allocation2 + $0x30] sm:$0xff]
    %v40 = vld [vmem:[#allocation2 + $0x38] sm:$0xff]
    %v41 = vld [vmem:[#allocation2 + $0x40] sm:$0xff]
    %v42 = vld [vmem:[#allocation2 + $0x48] sm:$0xff]
    %v43 = vld [vmem:[#allocation2 + $0x50] sm:$0xff]
    %v44 = vld [vmem:[#allocation2 + $0x58] sm:$0xff]
    %v45 = vld [vmem:[#allocation2 + $0x60] sm:$0xff]
    %v46 = vld [vmem:[#allocation2 + $0x68] sm:$0xff]
    %v47 = vld [vmem:[#allocation2 + $0x70] sm:$0xff]
    %v48 = vld [vmem:[#allocation2 + $0x78] sm:$0xff]
    %v49 = vld [vmem:[%s2] sm:$0x1]
    %v51 = vperm.slane %v49, 0
    %53 = vmatpush.msra.mxu0 %v48
    %54 = vmatpush.msra.mxu0 %v47
    %55 = vmatpush.msra.mxu0 %v46
    %56 = vmatpush.msra.mxu0 %v45
    %57 = vmatpush.msra.mxu0 %v44
    %58 = vmatpush.msra.mxu0 %v43
    %59 = vmatpush.msra.mxu0 %v42
    %60 = vmatpush.msra.mxu0 %v41
    %61 = vmatpush.msra.mxu0 %v40
    %62 = vmatpush.msra.mxu0 %v39
    %63 = vmatpush.msra.mxu0 %v38
    %64 = vmatpush.msra.mxu0 %v37
    %65 = vmatpush.msra.mxu0 %v36
    %66 = vmatpush.msra.mxu0 %v35
    %67 = vmatpush.msra.mxu0 %v34
    %68 = vmatpush.msra.mxu0 %v33
    %69 = vmatmul.f32.gmra.mxu0 %v31
    %v70 = vpop.f32.mrf.mxu0
    %v71 = vadd.f32 %v51, %v70
    %72 = vmatmul.f32.gmra.mxu0 %v32
    %v73 = vpop.f32.mrf.mxu0
    %v74 = vadd.f32 %v51, %v73
    %75 = vdwg.mxu0
    %v76 = vmul.f32 %v71, 0.1
    %v77 = vmul.f32 %v74, 0.1
    %v78 = vmax.f32 %v71, %v76
    %v79 = vmax.f32 %v74, %v77
    %80 = vst [vmem:[#allocation5] sm:$0xff] %v78
    %81 = vst [vmem:[#allocation5 + $0x8] sm:$0xff] %v79
    // Predicated region
    $region18: #{_mlp_call.1} parent=1 // pred_check
      _
    $region19: #{_mlp_call.1} parent=1 // pred_check_branch
      %83 = sbr.rel (0) target = $region21
    $region20: #{_mlp_call.1} parent=1 // pred_region
      %85 = vsyncadd [#allocation4], 0
      %s86 = sshll.u32 [#allocation5], 4
      %s87 = int_to_ptr.vmem [resolvable:$true] %s86
      %s88 = sshll.u32 %s3, 4
      %s89 = int_to_ptr.hbm [resolvable:$true] %s88
      %94 = dma.vmem_to_hbm [thread:$0]  %s87, 256, %s89, [#allocation4], 128, 128, 8
    $region21: #{_mlp_call.1} parent=1 // pred_fallthru
      _
    // Predicated region
    $region22: #{_mlp_call.1} parent=1 // pred_check
      _
    $region23: #{_mlp_call.1} parent=1 // pred_check_branch
      %96 = sbr.rel (0) target = $region25
    $region24: #{_mlp_call.1} parent=1 // pred_region
      %98 = dma.done [#allocation4], 256
    $region25: #{_mlp_call.1} parent=1 // pred_fallthru
      _
    %99 = vsyncpa [#allocation3], 1
    %100 = vsyncpa [#allocation4], 1

</llo_original>
